<compile_context>
chip_gen: v5e
topology: v5e:2x2
jax: 0.10.0
libtpu: 0.0.40
codegen_flags: <defaults>
</compile_context>

<pallas_src>
import functools

import jax
import jax.numpy as jnp
from jax.experimental import pallas as pl
from jax.experimental.pallas import tpu as pltpu


# Single lane-aligned channel block holding every model's conv channels plus a
# shared constant-1 bias channel.
C_PAD = 128


def _round_up(x, m):
    return (x + m - 1) // m * m


# ----------------------------------------------------------------------------
# Kernel 1: fused conv-as-matmul + ReLU + global-average-pool accumulator.
#   patches_ref : (TILE_ROWS, KP)  bf16 row tile of one image's im2col patches
#   wc_ref      : (KP, C_PAD)      bf16 packed conv weights (all models+biases)
#   out_ref     : (1, C_PAD)       f32 pooled activations for image n
#   acc_ref     : (1, C_PAD)       f32 VMEM pooled-sum accumulator
# grid = (N_images, tiles_per_image); axis 0 "parallel", axis 1 "arbitrary".
# ----------------------------------------------------------------------------
def _conv_pool_kernel(patches_ref, wc_ref, out_ref, acc_ref, *, inv_hw):
    t = pl.program_id(1)

    @pl.when(t == 0)
    def _init():
        acc_ref[...] = jnp.zeros_like(acc_ref)

    # conv (im2col matmul, conv bias folded via the ones column) + ReLU.
    # bf16 operands, f32 MXU accumulation.
    y = jnp.dot(patches_ref[...], wc_ref[...],
                preferred_element_type=jnp.float32)        # (TILE_ROWS, C_PAD)
    y = jnp.maximum(y, 0.0)

    # global average pooling: accumulate the spatial sum (sublane reduce).
    # Zero-padded remainder rows (bias column = 0) contribute exactly 0.
    acc_ref[...] += jnp.sum(y, axis=0, keepdims=True)

    @pl.when(t == pl.num_programs(1) - 1)
    def _finalize():
        out_ref[...] = acc_ref[...] * inv_hw               # mean over true H*W


# ----------------------------------------------------------------------------
# Kernel 2: batched retrieval head, one (N, C_PAD) x (C_PAD, M*F) MXU matmul.
# Head biases are folded in via the constant-1 channel row.  Full-array blocks.
# ----------------------------------------------------------------------------
def _head_kernel(z_ref, wf_ref, out_ref):
    out_ref[...] = jnp.dot(z_ref[...], wf_ref[...],
                           preferred_element_type=jnp.float32)


def _im2col_3x3(x):
    """x: (N, Cin, H, W) NCHW, 3x3 conv, stride 1, pad 1 -> (N, H*W, Cin*9)."""
    N, Cin, H, W = x.shape
    xp = jnp.pad(x, ((0, 0), (0, 0), (1, 1), (1, 1)))
    cols = [xp[:, :, dh:dh + H, dw:dw + W] for dh in range(3) for dw in range(3)]
    p = jnp.stack(cols, axis=0)                  # (9, N, Cin, H, W)
    p = p.transpose(1, 3, 4, 2, 0)               # (N, H, W, Cin, 9)
    return p.reshape(N, H * W, Cin * 9)


def _pick_tile_rows(hw, max_tile=2048):
    """Row-tile size: multiple of 8, capped so VMEM never blows up.

    Non-divisors of hw are fine: the wrapper zero-pads the remainder rows.
    bf16 tile bytes at the cap: 2048 * 32 * 2 = 128 KiB per buffer.
    """
    return min(max_tile, _round_up(hw, 8))


def backbone_forward(image, params_list, tile_rows=None):
    """Run the fused Pallas backbone for M models on one image batch.

    image: (N, Cin, H, W) float32; params_list: list of M param dicts.
    Returns (M, N, F) retrieval features.
    """
    N, Cin, H, W = image.shape
    HW = H * W
    M = len(params_list)
    C = params_list[0]["wc"].shape[-1]
    F = params_list[0]["wf"].shape[-1]
    K = Cin * 9
    KP = _round_up(K + 1, 8)                     # + bias column, sublane-rounded
    assert M * C + 1 <= C_PAD

    if tile_rows is None:
        tile_rows = _pick_tile_rows(HW)
    tile_rows = _round_up(tile_rows, 8)
    tiles_per_img = -(-HW // tile_rows)          # ceil div (plain Python int)
    HW_pad = tiles_per_img * tile_rows

    # --- im2col + bias column + zero-padded remainder rows, cast to bf16 -----
    # TODO(synk): in-kernel patch extraction (halo DMA + 9 shifted matmuls)
    # would avoid materializing the 9x patch slab in HBM entirely.
    patches = _im2col_3x3(image.astype(jnp.float32))        # (N, HW, K)
    pp = jnp.zeros((N, HW_pad, KP), jnp.float32)
    pp = pp.at[:, :HW, :K].set(patches)
    pp = pp.at[:, :HW, K].set(1.0)               # bias column (real rows only)
    pp = pp.reshape(N * HW_pad, KP).astype(jnp.bfloat16)

    # --- weight packing: all models share one 128-lane channel block ---------
    # Columns [m*C, (m+1)*C) hold model m's conv weight (bias in the ones row);
    # column M*C is a shared constant-1 channel (value 1 after ReLU + pooling)
    # that folds every model's head bias into the head matmul.
    wc_cat = jnp.zeros((KP, C_PAD), jnp.float32)
    wf_bd = jnp.zeros((C_PAD, M * F), jnp.float32)
    for m, p in enumerate(params_list):
        c0, f0 = m * C, m * F
        wc_cat = wc_cat.at[:K, c0:c0 + C].set(p["wc"].astype(jnp.float32))
        wc_cat = wc_cat.at[K, c0:c0 + C].set(p["bc"].astype(jnp.float32))
        wf_bd = wf_bd.at[c0:c0 + C, f0:f0 + F].set(p["wf"].astype(jnp.float32))
        wf_bd = wf_bd.at[M * C, f0:f0 + F].set(p["bf"].astype(jnp.float32))
    wc_cat = wc_cat.at[K, M * C].set(1.0)        # shared constant-1 channel
    wc_cat = wc_cat.astype(jnp.bfloat16)

    kernel = functools.partial(_conv_pool_kernel, inv_hw=1.0 / HW)

    pooled = pl.pallas_call(
        kernel,
        out_shape=jax.ShapeDtypeStruct((N, 1, C_PAD), jnp.float32),
        grid=(N, tiles_per_img),
        in_specs=[
            # per-(image, tile) patch block — double-buffered by the pipeline;
            # last dim is the full KP (=32) extent -> no HBM lane padding.
            pl.BlockSpec((tile_rows, KP),
                         lambda n, t: (n * tiles_per_img + t, 0)),
            # packed conv weights stay resident in VMEM across the whole grid
            pl.BlockSpec((KP, C_PAD), lambda n, t: (0, 0)),
        ],
        out_specs=pl.BlockSpec((None, 1, C_PAD), lambda n, t: (n, 0, 0)),
        scratch_shapes=[pltpu.VMEM((1, C_PAD), jnp.float32)],
        compiler_params=pltpu.CompilerParams(
            dimension_semantics=("parallel", "arbitrary")),
    )(pp, wc_cat)

    pooled = pooled.reshape(N, C_PAD)

    # Batched head matmul over all images at once (full-array blocks, tiny).
    feats = pl.pallas_call(
        _head_kernel,
        out_shape=jax.ShapeDtypeStruct((N, M * F), jnp.float32),
    )(pooled, wf_bd)

    return feats.reshape(N, M, F).transpose(1, 0, 2)        # (M, N, F)


def _backbone_reference(image, params):
    """Pure-JAX f32 reference of the same backbone (correctness check)."""
    patches = _im2col_3x3(image.astype(jnp.float32))        # (N, HW, K)
    y = jnp.maximum(patches @ params["wc"] + params["bc"], 0.0)
    z = y.mean(axis=1)                                      # (N, C)
    return z @ params["wf"] + params["bf"]


def init_backbone_params(key, cin=3, c=8, feat_dim=32):
    k1, k2, k3, k4 = jax.random.split(key, 4)
    return dict(
        wc=jax.random.normal(k1, (cin * 9, c), jnp.float32) * 0.1,
        bc=jax.random.normal(k2, (c,), jnp.float32) * 0.01,
        wf=jax.random.normal(k3, (c, feat_dim), jnp.float32) * 0.1,
        bf=jax.random.normal(k4, (feat_dim,), jnp.float32) * 0.01,
    )


class Distiller:
    """JAX/Pallas analogue of the PyTorch Distiller base class."""

    def __init__(self, student_params, teacher_params,
                 ce_loss_weight=1.0, tri_loss_weight=1.0):
        self.student = student_params
        self.teacher = teacher_params          # frozen (no grads taken here)
        self.ce_loss_weight = ce_loss_weight
        self.tri_loss_weight = tri_loss_weight

    def get_learnable_parameters(self):
        return list(self.student.items())

    def get_extra_parameters(self):
        return 0

    def get_base_parameters(self):
        num_p = sum(int(v.size) for k, v in self.student.items()
                    if "classifier" not in k)
        return num_p / 1e6

    def forward_query(self, image, tile_rows=None):
        # student(image) -> feature_student['retrieval_feat']
        return backbone_forward(image, [self.student], tile_rows)[0]

    def forward_gallery(self, image, tile_rows=None):
        # teacher(image) -> feature_teacher['retrieval_feat']
        return backbone_forward(image, [self.teacher], tile_rows)[0]

    def forward_query_and_gallery(self, image, tile_rows=None):
        # Fused path: one conv/pool kernel, patches DMA'd once for both models.
        both = backbone_forward(image, [self.student, self.teacher], tile_rows)
        return both[0], both[1]

    def forward_train(self, **kwargs):
        # TODO(synk): forward_train (triplet + CE distillation loss) is abstract
        # (NotImplementedError) in the base class; subclasses define it.
        raise NotImplementedError()

    def forward(self, **kwargs):
        return self.forward_train(**kwargs)


if __name__ == "__main__":
    key = jax.random.PRNGKey(0)
    k_img, k_s, k_t = jax.random.split(key, 3)

    # batch=2, channels=3 (RGB), spatial=16; N>=2 keeps the "parallel" image
    # axis shardable across v7x's two TensorCores.
    image = jax.random.normal(k_img, (2, 3, 16, 16), jnp.float32)

    student_params = init_backbone_params(k_s, cin=3, c=8, feat_dim=32)
    teacher_params = init_backbone_params(k_t, cin=3, c=8, feat_dim=32)

    distiller = Distiller(student_params, teacher_params,
                          ce_loss_weight=1.0, tri_loss_weight=1.0)

    # fused student+teacher path (single conv/pool kernel, shared patch DMA);
    # tile_rows=96 exercises the multi-step accumulation AND the zero-padded
    # remainder tile (HW=256 -> 3 tiles of 96 rows, 32 padded rows).
    q_feat, g_feat = distiller.forward_query_and_gallery(image, tile_rows=96)
    jax.block_until_ready((q_feat, g_feat))

    # correctness check against a pure-JAX f32 reference (bf16 tolerance)
    q_ref = _backbone_reference(image, student_params)
    g_ref = _backbone_reference(image, teacher_params)
    assert q_feat.shape == (2, 32) and g_feat.shape == (2, 32)
    assert jnp.allclose(q_feat, q_ref, atol=5e-2, rtol=5e-2)
    assert jnp.allclose(g_feat, g_ref, atol=5e-2, rtol=5e-2)

    # also exercise the base-class per-model entry points (M=1, default tiles)
    q_single = distiller.forward_query(image)
    g_single = distiller.forward_gallery(image)
    jax.block_until_ready((q_single, g_single))
    assert jnp.allclose(q_single, q_ref, atol=5e-2, rtol=5e-2)
    assert jnp.allclose(g_single, g_ref, atol=5e-2, rtol=5e-2)

    print("KERNEL_OK")
</pallas_src>

<mosaic_0001>
module attributes {stable_mosaic.version = 11 : i64} {
  func.func @_conv_pool_kernel(%arg0: i32, %arg1: i32, %arg2: memref<96x32xbf16, #tpu.memory_space<vmem>>, %arg3: memref<32x128xbf16, #tpu.memory_space<vmem>>, %arg4: memref<1x1x128xf32, #tpu.memory_space<vmem>>, %arg5: memref<1x128xf32, #tpu.memory_space<vmem>>) attributes {dimension_semantics = [#tpu.dimension_semantics<parallel>, #tpu.dimension_semantics<arbitrary>], iteration_bounds = array<i64: 2, 3>, scalar_prefetch = 0 : i64, scratch_operands = 1 : i64, tpu.core_type = #tpu.core_type<tc>, window_params = [{transform_indices = @transform_0, window_bounds = array<i64: 96, 32>}, {pipeline_mode = #tpu.pipeline_mode<synchronous>, transform_indices = @transform_1, window_bounds = array<i64: 32, 128>}, {transform_indices = @transform_2, window_bounds = array<i64: 1, 1, 128>}]} {
    %c0_i32 = arith.constant 0 : i32
    %0 = arith.cmpi eq, %arg1, %c0_i32 : i32
    %1 = arith.extui %0 : i1 to i32
    %c0_i32_0 = arith.constant 0 : i32
    %2 = arith.cmpi ne, %1, %c0_i32_0 : i32
    scf.if %2 {
      %cst_11 = arith.constant 0.000000e+00 : f32
      %16 = vector.broadcast %cst_11 : f32 to vector<1x128xf32>
      %c0_12 = arith.constant 0 : index
      %c0_13 = arith.constant 0 : index
      %17 = vector.load %arg5[%c0_12, %c0_13] : memref<1x128xf32, #tpu.memory_space<vmem>>, vector<1x128xf32>
      tpu.vector_store %arg5[%c0_12, %c0_13], %16 {strides = array<i32>} : memref<1x128xf32, #tpu.memory_space<vmem>>, vector<1x128xf32>,
    } else {
    }
    %c0 = arith.constant 0 : index
    %c0_1 = arith.constant 0 : index
    %3 = vector.load %arg2[%c0, %c0_1] : memref<96x32xbf16, #tpu.memory_space<vmem>>, vector<96x32xbf16>
    %c0_2 = arith.constant 0 : index
    %c0_3 = arith.constant 0 : index
    %4 = vector.load %arg3[%c0_2, %c0_3] : memref<32x128xbf16, #tpu.memory_space<vmem>>, vector<32x128xbf16>
    %cst = arith.constant dense<0.000000e+00> : vector<96x128xf32>
    %5 = tpu.matmul %3, %4, %cst {dimension_numbers = #tpu.dot_dimension_numbers<[1], [0], [0], [1], [0, 0, 1, 1], [], []>} : vector<96x32xbf16>, vector<32x128xbf16>, vector<96x128xf32> -> vector<96x128xf32>
    %cst_4 = arith.constant 0.000000e+00 : f32
    %6 = vector.broadcast %cst_4 : f32 to vector<96x128xf32>
    %7 = arith.maximumf %5, %6 : vector<96x128xf32>
    %c0_5 = arith.constant 0 : index
    %c0_6 = arith.constant 0 : index
    %8 = vector.load %arg5[%c0_5, %c0_6] : memref<1x128xf32, #tpu.memory_space<vmem>>, vector<1x128xf32>
    %cst_7 = arith.constant dense<0.000000e+00> : vector<128xf32>
    %9 = vector.multi_reduction <add>, %7, %cst_7 [0] : vector<96x128xf32> to vector<128xf32>
    %10 = vector.shape_cast %9 : vector<128xf32> to vector<1x128xf32>
    %11 = arith.addf %8, %10 : vector<1x128xf32>
    %c0_8 = arith.constant 0 : index
    %c0_9 = arith.constant 0 : index
    %12 = vector.load %arg5[%c0_8, %c0_9] : memref<1x128xf32, #tpu.memory_space<vmem>>, vector<1x128xf32>
    tpu.vector_store %arg5[%c0_8, %c0_9], %11 {strides = array<i32>} : memref<1x128xf32, #tpu.memory_space<vmem>>, vector<1x128xf32>,
    %c2_i32 = arith.constant 2 : i32
    %13 = arith.cmpi eq, %arg1, %c2_i32 : i32
    %14 = arith.extui %13 : i1 to i32
    %c0_i32_10 = arith.constant 0 : i32
    %15 = arith.cmpi ne, %14, %c0_i32_10 : i32
    scf.if %15 {
      %c0_11 = arith.constant 0 : index
      %c0_12 = arith.constant 0 : index
      %16 = vector.load %arg5[%c0_11, %c0_12] : memref<1x128xf32, #tpu.memory_space<vmem>>, vector<1x128xf32>
      %cst_13 = arith.constant 3.906250e-03 : f32
      %17 = vector.broadcast %cst_13 : f32 to vector<1x128xf32>
      %18 = arith.mulf %16, %17 : vector<1x128xf32>
      %c0_14 = arith.constant 0 : index
      %c0_15 = arith.constant 0 : index
      %c0_16 = arith.constant 0 : index
      %19 = vector.load %arg4[%c0_14, %c0_15, %c0_16] : memref<1x1x128xf32, #tpu.memory_space<vmem>>, vector<1x1x128xf32>
      %20 = vector.shape_cast %19 : vector<1x1x128xf32> to vector<1x128xf32>
      %21 = vector.shape_cast %18 : vector<1x128xf32> to vector<1x1x128xf32>
      tpu.vector_store %arg4[%c0_14, %c0_15, %c0_16], %21 {strides = array<i32>} : memref<1x1x128xf32, #tpu.memory_space<vmem>>, vector<1x1x128xf32>,
    } else {
    }
    return
  }
  func.func @transform_0(%arg0: i32, %arg1: i32) -> (i32, i32) {
    %c3_i32 = arith.constant 3 : i32
    %0 = arith.muli %arg0, %c3_i32 : i32
    %1 = arith.addi %0, %arg1 : i32
    %c0_i32 = arith.constant 0 : i32
    %c0_i32_0 = arith.constant 0 : i32
    return %1, %c0_i32 : i32, i32
  }
  func.func @transform_1(%arg0: i32, %arg1: i32) -> (i32, i32) {
    %c0_i32 = arith.constant 0 : i32
    %c0_i32_0 = arith.constant 0 : i32
    %c0_i32_1 = arith.constant 0 : i32
    return %c0_i32, %c0_i32_0 : i32, i32
  }
  func.func @transform_2(%arg0: i32, %arg1: i32) -> (i32, i32, i32) {
    %c0_i32 = arith.constant 0 : i32
    %c0_i32_0 = arith.constant 0 : i32
    %c0_i32_1 = arith.constant 0 : i32
    return %arg0, %c0_i32, %c0_i32_0 : i32, i32, i32
  }
}

</mosaic_0001>

<llo_original>
// kernel: tpu_custom_call.1
$region0: #{tpu_custom_call.1}
  #allocation0 [shape = 'u32[]', space=smem, size = 0x4, offset = 0x4, fixed_abs, tag = 'smem constant byte address 0x4 - core index']
  #allocation1 [shape = 'u32[72,128]{1,0:T(1,128)}', space=vmem, size = 0x9000, scoped, tag = 'internal scratch']
  #allocation2 [shape = 'f32[1,128]{1,0:T(1,128)}', space=vmem, size = 0x200, scoped, tag = 'scratch operand']
  %s0 = inlined_call_operand.vmem [shape: bf16[576,32], index: 0, kind: input, shape index: {}]
  %s1 = inlined_call_operand.vmem [shape: bf16[32,128], index: 1, kind: input, shape index: {}]
  %s2 = inlined_call_operand.hbm [shape: f32[2,1,128], index: 2, kind: output, shape index: {}]
  %s3 = sld [smem:[#allocation0]]
  $region49: #{tpu_custom_call.1} parent=0
    _
  %s5 = ssub.s32 1, %s3
  %s6 = scalar_select 0, %s5, %s3
  $region1: #{tpu_custom_call.1} parent=0
    #allocation3 [shape = 'u8[1024]{0}', space=vmem, size = 0x400, scoped, tag = 'output window, operand 0']
    #allocation4 [shape = 's32[2]{0}', space=sflag, size = 0x8, scoped, tag = 'scoped memory for tpu_custom_call.1']
    %7 = vsyncpa [#allocation4], 0
    %s8 = scalar_lea.sflag [#allocation4], 1
    %9 = vsyncpa %s8, 0
    loop: start=0, step=1, limit=8
    $region2: #{tpu_custom_call.1} parent=1 // loop_pre_header
      _
    $region3: #{tpu_custom_call.1} parent=1 // loop_header
      %s11 = sphi 0, %s15
      %p12 = scmp.ge.s32.totalorder %s11, 8
      %s18 = sphi 0, %s30
      %s19 = sphi 0, %s26
      %s20 = sphi 0, %s18
      %s21 = sphi 0, %s19
      %s22 = sphi 0, %s20
      %s23 = sphi 0, %s21
      %s37 = sphi 0, %s39
      %s40 = sphi 0, %s37
      %s41 = sphi 0, %s40
      %s57 = sphi 0, %s41
      %s61 = sphi 0, %s61
      %s63 = sphi 0, %s61
      %s64 = sphi 0, %s63
      %s78 = sphi 0, %s64
      %s84 = sphi 0, %s86
      %s87 = sphi 0, %s84
      %s88 = sphi 0, %s87
      %s104 = sphi 0, %s88
    $region4: #{tpu_custom_call.1} parent=1 // loop_header_branch
      %14 = sbr.rel (%p12) target = $region8
    $region5: #{tpu_custom_call.1} parent=1 // loop_body
      %s16 = ssub.s32 %s11, 1
      %s17 = ssub.s32 %s11, 2
      %s24 = sadd.s32 1, %s19
      %p25 = scmp.ge.s32.totalorder %s24, 3
      %s26 = scalar_select %p25, 0, %s24
      %s27 = sadd.s32 1, %s18
      %s28 = scalar_select %p25, %s27, %s18
      %p29 = scmp.ge.s32.totalorder %s28, 2
      %s30 = scalar_select %p29, 0, %s28
      %s31 = smul.u32 %s18, 3
      %s32 = sadd.s32 %s31, %s19
      %s33 = smul.u32 %s30, 3
      %s34 = sadd.s32 %s33, %s26
      %s35 = ssub.s32 %s32, %s34
      %p36 = scmp.eq.s32.totalorder %s35, 0
      %s38 = sadd.s32 %s37, 1
      %s39 = scalar_select %p36, %s37, %s38
      %p42 = pneg %p36
      %p43 = scmp.eq.s32.totalorder %s11, 5
      %p44 = por %p42, %p43
      %p45 = scmp.ne.s32.totalorder %s37, %s40
      %p46 = scmp.eq.s32.totalorder %s11, 0
      %p47 = por %p45, %p46
      %p48 = scmp.ne.s32.totalorder %s37, %s40
      %p49 = scmp.eq.s32.totalorder %s16, 5
      %p50 = por %p48, %p49
      %p51 = scmp.ne.s32.totalorder %s40, %s41
      %p52 = scmp.eq.s32.totalorder %s16, 0
      %p53 = por %p51, %p52
      %p54 = scmp.ne.s32.totalorder %s40, %s41
      %p55 = scmp.eq.s32.totalorder %s17, 5
      %p56 = por %p54, %p55
      %p58 = scmp.ne.s32.totalorder %s41, %s57
      %p59 = scmp.eq.s32.totalorder %s17, 0
      %p60 = por %p58, %p59
      %s62 = sadd.s32 %s61, 1
      %p65 = scmp.eq.s32.totalorder %s11, 5
      %p66 = scmp.ne.s32.totalorder %s61, %s63
      %p67 = scmp.eq.s32.totalorder %s11, 0
      %p68 = por %p66, %p67
      %p69 = scmp.ne.s32.totalorder %s61, %s63
      %p70 = scmp.eq.s32.totalorder %s16, 5
      %p71 = por %p69, %p70
      %p72 = scmp.ne.s32.totalorder %s63, %s64
      %p73 = scmp.eq.s32.totalorder %s16, 0
      %p74 = por %p72, %p73
      %p75 = scmp.ne.s32.totalorder %s63, %s64
      %p76 = scmp.eq.s32.totalorder %s17, 5
      %p77 = por %p75, %p76
      %p79 = scmp.ne.s32.totalorder %s64, %s78
      %p80 = scmp.eq.s32.totalorder %s17, 0
      %p81 = por %p79, %p80
      %s82 = ssub.s32 %s18, %s30
      %p83 = scmp.eq.s32.totalorder %s82, 0
      %s85 = sadd.s32 %s84, 1
      %s86 = scalar_select %p83, %s84, %s85
      %p89 = pneg %p83
      %p90 = scmp.eq.s32.totalorder %s11, 5
      %p91 = por %p89, %p90
      %p92 = scmp.ne.s32.totalorder %s84, %s87
      %p93 = scmp.eq.s32.totalorder %s11, 0
      %p94 = por %p92, %p93
      %p95 = scmp.ne.s32.totalorder %s84, %s87
      %p96 = scmp.eq.s32.totalorder %s16, 5
      %p97 = por %p95, %p96
      %p98 = scmp.ne.s32.totalorder %s87, %s88
      %p99 = scmp.eq.s32.totalorder %s16, 0
      %p100 = por %p98, %p99
      %p101 = scmp.ne.s32.totalorder %s87, %s88
      %p102 = scmp.eq.s32.totalorder %s17, 5
      %p103 = por %p101, %p102
      %p105 = scmp.ne.s32.totalorder %s88, %s104
      %p106 = scmp.eq.s32.totalorder %s17, 0
      %p107 = por %p105, %p106
      %p108 = scmp.le.s32.totalorder 1, %s11
      %p109 = scmp.lt.s32.totalorder %s11, 7
      %p110 = pnand %p108, %p109
      %p111 = pneg %p110
      // Predicated region
      $region9: #{tpu_custom_call.1} parent=5 // pred_check
        _
      $region10: #{tpu_custom_call.1} parent=5 // pred_check_branch
        %113 = sbr.rel (%p110) target = $region12
      $region11: #{tpu_custom_call.1} parent=5 // pred_region
        %s114 = ssub.s32 %s11, 1
        // Predicated region
        $region13: #{tpu_custom_call.1} parent=11 // pred_check
          %p115 = pneg %p74
        $region14: #{tpu_custom_call.1} parent=11 // pred_check_branch
          %117 = sbr.rel (%p115) target = $region16
        $region15: #{tpu_custom_call.1} parent=11 // pred_region
          _
        $region16: #{tpu_custom_call.1} parent=11 // pred_fallthru
          _
      $region12: #{tpu_custom_call.1} parent=5 // pred_fallthru
        _
      %p118 = scmp.lt.s32.totalorder %s11, 6
      // Predicated region
      $region17: #{tpu_custom_call.1} parent=5 // pred_check
        %p119 = pneg %p118
      $region18: #{tpu_custom_call.1} parent=5 // pred_check_branch
        %121 = sbr.rel (%p119) target = $region20
      $region19: #{tpu_custom_call.1} parent=5 // pred_region
        // Predicated region
        $region21: #{tpu_custom_call.1} parent=19 // pred_check
          %p122 = pneg %p47
        $region22: #{tpu_custom_call.1} parent=19 // pred_check_branch
          %124 = sbr.rel (%p122) target = $region24
        $region23: #{tpu_custom_call.1} parent=19 // pred_region
          %s125 = smul.u32 %s18, 3
          %s126 = sadd.s32 %s125, %s19
          %s127 = smul.u32 12, %s126
          %p128 = scmp.lt.s32.totalorder %s127, 71
          %s129 = scalar_select %p128, %s127, 71
          %s130 = smul.addr %s129, 4
          %s131 = scalar_lea.vmem %s0, %s130
          %s132 = smul.u32 %s18, 3
          %s133 = sadd.s32 %s132, %s19
          %s134 = smul.u32 12, %s133
        $region24: #{tpu_custom_call.1} parent=19 // pred_fallthru
          _
      $region20: #{tpu_custom_call.1} parent=5 // pred_fallthru
        _
      %p135 = scmp.le.s32.totalorder 1, %s11
      %p136 = scmp.lt.s32.totalorder %s11, 7
      %p137 = pnand %p135, %p136
      %p138 = pneg %p137
      // Predicated region
      $region25: #{tpu_custom_call.1} parent=5 // pred_check
        _
      $region26: #{tpu_custom_call.1} parent=5 // pred_check_branch
        %140 = sbr.rel (%p137) target = $region28
      $region27: #{tpu_custom_call.1} parent=5 // pred_region
        %s141 = ssub.s32 %s11, 1
        %s142 = smul.u32 %s20, 3
        %s143 = sadd.s32 %s142, %s21
        %s144 = smul.u32 12, %s143
        %p145 = scmp.lt.s32.totalorder %s144, 71
        %s146 = scalar_select %p145, %s144, 71
        %s147 = smul.addr %s146, 4
        %s148 = scalar_lea.vmem %s0, %s147
        %p149 = pneg %p53
        %p150 = pneg %p50
        %p151 = pneg %p74
        %p152 = pneg %p71
        %p153 = pneg %p100
        %p154 = pneg %p97
        %s155 = sand.u32 %s87, 1
        %s156 = scalar_lea.sflag [#allocation4], %s155
        %s157 = sand.u32 %s87, 1
        %s158 = scalar_lea.vmem [#allocation3], %s157
        %s159 = smul.u32 %s20, 3
        %s160 = sadd.s32 %s159, %s21
        %s161 = smul.u32 12, %s160
        %p162 = scmp.lt.s32.totalorder %s161, 71
        %s163 = scalar_select %p162, %s161, 71
        %s164 = smul.addr %s163, 4
        %s165 = scalar_lea.vmem %s0, %s164
        %s166 = smul.u32 %s20, 3
        %s167 = sadd.s32 %s166, %s21
        %s168 = smul.u32 12, %s167
        %p170 = scmp.eq.s32.totalorder %s21, 0
        // Predicated region
        $region29: #{tpu_custom_call.1} parent=27 // pred_check
          %p171 = pneg %p170
        $region30: #{tpu_custom_call.1} parent=27 // pred_check_branch
          %173 = sbr.rel (%p171) target = $region32
        $region31: #{tpu_custom_call.1} parent=27 // pred_region
          %174 = vst [vmem:[#allocation2] sm:$0x1] 0.0
        $region32: #{tpu_custom_call.1} parent=27 // pred_fallthru
          _
        %v175 = vld [vmem:[%s165] sm:$0xf]
        %v176 = vld [vmem:[%s165 + $0x4] sm:$0xf]
        %v177 = vld [vmem:[%s165 + $0x8] sm:$0xf]
        %v178 = vld [vmem:[%s165 + $0xc] sm:$0xf]
        %v179 = vld [vmem:[%s165 + $0x10] sm:$0xf]
        %v180 = vld [vmem:[%s165 + $0x14] sm:$0xf]
        %v181 = vld [vmem:[%s165 + $0x18] sm:$0xf]
        %v182 = vld [vmem:[%s165 + $0x1c] sm:$0xf]
        %v183 = vld [vmem:[%s165 + $0x20] sm:$0xf]
        %v184 = vld [vmem:[%s165 + $0x24] sm:$0xf]
        %v185 = vld [vmem:[%s165 + $0x28] sm:$0xf]
        %v186 = vld [vmem:[%s165 + $0x2c] sm:$0xf]
        %v187 = vld [vmem:[%s1] sm:$0xf]
        %v188 = vld [vmem:[%s1 + $0x4] sm:$0xf]
        %v189 = vld [vmem:[%s1 + $0x8] sm:$0xf]
        %v190 = vld [vmem:[%s1 + $0xc] sm:$0xf]
        %v203 = vunpack.c.l.b16 %v175
        %v204 = vunpack.c.l.b16 %v176
        %v205 = vunpack.c.l.b16 %v177
        %v206 = vunpack.c.l.b16 %v178
        %v207 = vunpack.c.l.b16 %v179
        %v208 = vunpack.c.l.b16 %v180
        %v209 = vunpack.c.l.b16 %v181
        %v210 = vunpack.c.l.b16 %v182
        %v211 = vunpack.c.l.b16 %v183
        %v212 = vunpack.c.l.b16 %v184
        %v213 = vunpack.c.l.b16 %v185
        %v214 = vunpack.c.l.b16 %v186
        %v215 = vpack.c.b16 %v204, %v203
        %v216 = vpack.c.b16 %v206, %v205
        %v217 = vpack.c.b16 %v208, %v207
        %v218 = vpack.c.b16 %v210, %v209
        %v219 = vpack.c.b16 %v212, %v211
        %v220 = vpack.c.b16 %v214, %v213
        %v225 = vunpack.c.l.b16 %v187
        %v226 = vunpack.c.l.b16 %v188
        %v227 = vunpack.c.l.b16 %v189
        %v228 = vunpack.c.l.b16 %v190
        %v229 = vpack.c.b16 %v226, %v225
        %v230 = vpack.c.b16 %v228, %v227
        %vm233 = vcmask 261120
        %v235 = vsel %vm233, %v215, 0
        %v238 = vsel %vm233, %v216, 0
        %v241 = vsel %vm233, %v217, 0
        %v244 = vsel %vm233, %v218, 0
        %v247 = vsel %vm233, %v219, 0
        %v250 = vsel %vm233, %v220, 0
        %252 = vmatpush.bf16.msra.mxu0 0
        %253 = vmatpush.bf16.msra.mxu0 0
        %254 = vmatpush.bf16.msra.mxu0 0
        %255 = vmatpush.bf16.msra.mxu0 0
        %256 = vmatpush.bf16.msra.mxu0 0
        %257 = vmatpush.bf16.msra.mxu0 0
        %258 = vmatpush.bf16.msra.mxu0 %v230
        %259 = vmatpush.bf16.msra.mxu0 %v229
        %260 = vmatmul.bf16.gmra.mxu0 %v235
        %v261 = vpop.f32.mrf.mxu0
        %v262 = vadd.f32 0.0, %v261
        %v263 = vpop.f32.mrf.mxu0
        %v264 = vadd.f32 0.0, %v263
        %265 = vmatmul.bf16.gmra.mxu0 %v238
        %v266 = vpop.f32.mrf.mxu0
        %v267 = vadd.f32 0.0, %v266
        %v268 = vpop.f32.mrf.mxu0
        %v269 = vadd.f32 0.0, %v268
        %270 = vmatmul.bf16.gmra.mxu0 %v241
        %v271 = vpop.f32.mrf.mxu0
        %v272 = vadd.f32 0.0, %v271
        %v273 = vpop.f32.mrf.mxu0
        %v274 = vadd.f32 0.0, %v273
        %275 = vmatmul.bf16.gmra.mxu0 %v244
        %v276 = vpop.f32.mrf.mxu0
        %v277 = vadd.f32 0.0, %v276
        %v278 = vpop.f32.mrf.mxu0
        %v279 = vadd.f32 0.0, %v278
        %280 = vmatmul.bf16.gmra.mxu0 %v247
        %v281 = vpop.f32.mrf.mxu0
        %v282 = vadd.f32 0.0, %v281
        %v283 = vpop.f32.mrf.mxu0
        %v284 = vadd.f32 0.0, %v283
        %285 = vmatmul.bf16.gmra.mxu0 %v250
        %v286 = vpop.f32.mrf.mxu0
        %v287 = vadd.f32 0.0, %v286
        %v288 = vpop.f32.mrf.mxu0
        %v289 = vadd.f32 0.0, %v288
        %290 = vdwg.mxu0
        %v291 = vmax.f32 %v262, 0.0
        %v292 = vmax.f32 %v264, 0.0
        %v293 = vmax.f32 %v267, 0.0
        %v294 = vmax.f32 %v269, 0.0
        %v295 = vmax.f32 %v272, 0.0
        %v296 = vmax.f32 %v274, 0.0
        %v297 = vmax.f32 %v277, 0.0
        %v298 = vmax.f32 %v279, 0.0
        %v299 = vmax.f32 %v282, 0.0
        %v300 = vmax.f32 %v284, 0.0
        %v301 = vmax.f32 %v287, 0.0
        %v302 = vmax.f32 %v289, 0.0
        %v303 = vld [vmem:[#allocation2] sm:$0x1]
        %v304 = vadd.f32 %v291, %v292
        %v305 = vadd.f32 %v304, %v293
        %v306 = vadd.f32 %v305, %v294
        %v307 = vadd.f32 %v306, %v295
        %v308 = vadd.f32 %v307, %v296
        %v309 = vadd.f32 %v308, %v297
        %v310 = vadd.f32 %v309, %v298
        %v311 = vadd.f32 %v310, %v299
        %v312 = vadd.f32 %v311, %v300
        %v313 = vadd.f32 %v312, %v301
        %v314 = vadd.f32 %v313, %v302
        %v315 = vrot.slane %v314, 4
        %v316 = vadd.f32 %v314, %v315
        %v317 = vrot.slane %v316, 2
        %v318 = vadd.f32 %v316, %v317
        %v319 = vrot.slane %v318, 1
        %v320 = vadd.f32 %v318, %v319
        %v321 = vadd.f32 %v303, %v320
        %322 = vst [vmem:[#allocation2] sm:$0x1] %v321
        %p323 = scmp.eq.s32.totalorder %s21, 2
        // Predicated region
        $region33: #{tpu_custom_call.1} parent=27 // pred_check
          %p324 = pneg %p323
        $region34: #{tpu_custom_call.1} parent=27 // pred_check_branch
          %326 = sbr.rel (%p324) target = $region36
        $region35: #{tpu_custom_call.1} parent=27 // pred_region
          %v327 = vld [vmem:[#allocation2] sm:$0x1]
          %v328 = vmul.f32 %v327, 0.00390625
          %329 = vst [vmem:[%s158] sm:$0x1] %v328
        $region36: #{tpu_custom_call.1} parent=27 // pred_fallthru
          _
        %s330 = sand.u32 %s87, 1
        %s331 = scalar_lea.sflag [#allocation4], %s330
        %s332 = sand.u32 %s87, 1
        %s333 = scalar_lea.vmem [#allocation3], %s332
        // Predicated region
        $region37: #{tpu_custom_call.1} parent=27 // pred_check
          %p334 = pneg %p97
        $region38: #{tpu_custom_call.1} parent=27 // pred_check_branch
          %336 = sbr.rel (%p334) target = $region40
        $region39: #{tpu_custom_call.1} parent=27 // pred_region
          %338 = vsyncadd %s331, 0
          %s339 = scalar_lea.hbm %s2, %s20
          %s341 = sshll.u32 %s333, 4
          %s342 = int_to_ptr.vmem [resolvable:$true] %s341
          %s343 = sshll.u32 %s339, 4
          %s344 = int_to_ptr.hbm [resolvable:$true] %s343
          %346 = dma.vmem_to_hbm [thread:$0]  %s342, 16, %s344, %s331
        $region40: #{tpu_custom_call.1} parent=27 // pred_fallthru
          _
      $region28: #{tpu_custom_call.1} parent=5 // pred_fallthru
        _
      %p347 = scmp.le.s32.totalorder 2, %s11
      // Predicated region
      $region41: #{tpu_custom_call.1} parent=5 // pred_check
        %p348 = pneg %p347
      $region42: #{tpu_custom_call.1} parent=5 // pred_check_branch
        %350 = sbr.rel (%p348) target = $region44
      $region43: #{tpu_custom_call.1} parent=5 // pred_region
        %s351 = ssub.s32 %s11, 2
        // Predicated region
        $region45: #{tpu_custom_call.1} parent=43 // pred_check
          %p352 = pneg %p103
        $region46: #{tpu_custom_call.1} parent=43 // pred_check_branch
          %354 = sbr.rel (%p352) target = $region48
        $region47: #{tpu_custom_call.1} parent=43 // pred_region
          %s355 = sand.u32 %s88, 1
          %s356 = scalar_lea.sflag [#allocation4], %s355
          %s357 = sand.u32 %s88, 1
          %s358 = scalar_lea.vmem [#allocation3], %s357
          %360 = dma.done %s356, 16
        $region48: #{tpu_custom_call.1} parent=43 // pred_fallthru
          _
      $region44: #{tpu_custom_call.1} parent=5 // pred_fallthru
        _
    $region6: #{tpu_custom_call.1} parent=1 // loop_footer
      %s15 = sadd.s32 1, %s11
    $region7: #{tpu_custom_call.1} parent=1 // loop_footer_branch
      %10 = sbr.rel target = $region3
    $region8: #{tpu_custom_call.1} parent=1 // loop_exit
      _
    %361 = vsyncpa [#allocation4], 1
    %s362 = scalar_lea.sflag [#allocation4], 1
    %363 = vsyncpa %s362, 1

</llo_original>
